<compile_context>
chip_gen: v6e
topology: v6e:2x2x1
jax: 0.10.0
libtpu: 0.0.40
codegen_flags: <defaults>
</compile_context>

<pallas_src>
import numpy as np
import jax
import jax.numpy as jnp
from jax.experimental import pallas as pl
from jax.experimental.pallas import tpu as pltpu


# --------------------------------------------------------------------------
# Static slab layout (pure Python, evaluated at trace / pack time)
# --------------------------------------------------------------------------
def _slab_layout(latent_dims, distance, channels):
    D, C, L = distance, channels, latent_dims
    Pp = int(0.5 * (D + 3))                 # pooled spatial size
    NI, QO = C * D * D, Pp * Pp * 10        # flat image size, pooled feature size
    entries = ([(f"w_conv{i}", NI, QO) for i in range(4)] +      # folded conv+pool
               [("b_conv", 1, QO),
                ("w_lin", QO, 10), ("b_lin", 1, 10),
                ("w_l1", 4 * D, 20), ("b_l1", 1, 20),
                ("w_l2", 20, 10), ("b_l2", 1, 10),
                ("w_head_s", 10, 2 * L), ("w_head_l", 10, 2 * L),
                ("b_head", 1, 2 * L)])
    width = max(c for _, _, c in entries)   # == QO
    layout, off = {}, 0
    for name, r, c in entries:
        layout[name] = (off, r, c)
        off += -(-r // 16) * 16             # 16-row (bf16 sublane-tile) aligned
    return layout, off, width


# --------------------------------------------------------------------------
# One-time weight packing (all PyTorch-layout transforms + im2col fold here)
# --------------------------------------------------------------------------
def pack_params(params, latent_dims, distance, channels):
    D, C, L = distance, channels, latent_dims
    Ho, Pp = D + 1, int(0.5 * (D + 3))
    Q, NI, QO = Pp * Pp, C * D * D, Pp * Pp * 10

    # conv weight (10, C, 2, 2) -> (kh, kw, c, oc) -> (4C, 10)
    w_mat = np.transpose(np.asarray(params["conv_w"], np.float32),
                         (2, 3, 1, 0)).reshape(4 * C, 10)
    conv_b = np.asarray(params["conv_b"], np.float32)

    # Fold circular pad + im2col + the 4 max-pool window candidates into 4
    # dense (NI, Q*10) matrices: in-kernel the conv/pool stage becomes
    #   pooled = relu(max_a(x_flat @ fold[a]) + b_conv).
    # Out-of-range pool candidates are clamped onto a valid candidate of the
    # same window (duplicates never change the max; every window has >=1 valid
    # conv position for this pool config), and bias/ReLU commute with the max.
    fold = np.zeros((4, NI, QO), np.float32)
    for a in range(2):
        for b in range(2):
            cand = 2 * a + b
            for pi in range(Pp):
                ci = min(max(2 * pi - 1 + a, 0), Ho - 1)
                for pj in range(Pp):
                    cj = min(max(2 * pj - 1 + b, 0), Ho - 1)
                    col0 = (pi * Pp + pj) * 10            # lane order (pi, pj, oc)
                    for di in range(2):
                        ri = (ci + di - 1) % D            # circular-pad fold
                        for dj in range(2):
                            rj = (cj + dj - 1) % D
                            for c in range(C):
                                n = (c * D + ri) * D + rj  # raw NCHW flat index
                                fold[cand, n, col0:col0 + 10] += w_mat[(2 * di + dj) * C + c]

    # linear weight (10, 10*Pp*Pp): reorder its input axis from PyTorch's
    # flatten order (oc, pi, pj) to the kernel's pooled lane order (pi, pj, oc).
    w_lin = np.transpose(np.asarray(params["linear_w"], np.float32)
                         .reshape(10, 10, Pp, Pp), (2, 3, 1, 0)).reshape(QO, 10)

    wm = np.asarray(params["mean_w"], np.float32).T       # (20, L)
    wv = np.asarray(params["logvar_w"], np.float32).T
    tensors = {
        **{f"w_conv{i}": fold[i] for i in range(4)},
        "b_conv": np.tile(conv_b, Q).reshape(1, QO),
        "w_lin": w_lin,
        "b_lin": np.asarray(params["linear_b"], np.float32).reshape(1, 10),
        "w_l1": np.asarray(params["l1_w"], np.float32).T,
        "b_l1": np.asarray(params["l1_b"], np.float32).reshape(1, 20),
        "w_l2": np.asarray(params["l2_w"], np.float32).T,
        "b_l2": np.asarray(params["l2_b"], np.float32).reshape(1, 10),
        "w_head_s": np.concatenate([wm[:10], wv[:10]], axis=1),   # (10, 2L)
        "w_head_l": np.concatenate([wm[10:], wv[10:]], axis=1),   # (10, 2L)
        "b_head": np.concatenate([np.asarray(params["mean_b"], np.float32),
                                  np.asarray(params["logvar_b"], np.float32)]
                                 ).reshape(1, 2 * L),
    }

    layout, total_rows, width = _slab_layout(L, D, C)
    slab = np.zeros((total_rows, width), np.float32)
    for name, (off, r, c) in layout.items():
        slab[off:off + r, :c] = tensors[name]
    # bf16 slab: MXU-native operands, half the weight DMA bytes.
    return jnp.asarray(slab).astype(jnp.bfloat16)


# --------------------------------------------------------------------------
# Fused forward pass: one Pallas kernel, no grid (latency-bound at B=2)
# --------------------------------------------------------------------------
@jax.jit
def encoder_forward(slab, x0, x1, eps):
    B, C, D, _ = x0.shape
    L, NS = eps.shape[1], x1.shape[1]
    NI = C * D * D
    layout, _, _ = _slab_layout(L, D, C)
    QO = layout["b_conv"][2]

    # Single merged activation operand: [flat image | syndrome | eps].
    act = jnp.concatenate([x0.reshape(B, NI), x1, eps], axis=1).astype(jnp.float32)

    def wslice(ref, name):                  # static, aligned slice of the slab
        off, r, c = layout[name]
        return ref[off:off + r, 0:c]

    def kernel(act_ref, w_ref, out_ref):
        act_v = act_ref[...]
        xi = act_v[:, 0:NI].astype(jnp.bfloat16)                 # image
        xs = act_v[:, NI:NI + NS].astype(jnp.bfloat16)           # syndrome
        eps_v = act_v[:, NI + NS:NI + NS + L]                    # noise (f32)

        # conv (circular pad + im2col folded into weights) + bias + ReLU +
        # 2x2/stride-2 max-pool: 4 independent MXU dots (same LHS, so they
        # stream back-to-back) followed by a VPU max tree; bias/ReLU hoisted.
        c0 = jnp.dot(xi, wslice(w_ref, "w_conv0"), preferred_element_type=jnp.float32)
        c1 = jnp.dot(xi, wslice(w_ref, "w_conv1"), preferred_element_type=jnp.float32)
        c2 = jnp.dot(xi, wslice(w_ref, "w_conv2"), preferred_element_type=jnp.float32)
        c3 = jnp.dot(xi, wslice(w_ref, "w_conv3"), preferred_element_type=jnp.float32)
        m = jnp.maximum(jnp.maximum(c0, c1), jnp.maximum(c2, c3))
        pooled = jnp.maximum(m + wslice(w_ref, "b_conv"), 0.0)   # (B, Q*10) f32

        s = jnp.maximum(
            jnp.dot(pooled.astype(jnp.bfloat16), wslice(w_ref, "w_lin"),
                    preferred_element_type=jnp.float32) + wslice(w_ref, "b_lin"), 0.0)
        # TODO(synk): nn.Dropout(0.3) is identity in eval mode; training-mode
        # random masking is not implemented here.
        l = jnp.maximum(
            jnp.dot(xs, wslice(w_ref, "w_l1"),
                    preferred_element_type=jnp.float32) + wslice(w_ref, "b_l1"), 0.0)
        l = jnp.maximum(
            jnp.dot(l.astype(jnp.bfloat16), wslice(w_ref, "w_l2"),
                    preferred_element_type=jnp.float32) + wslice(w_ref, "b_l2"), 0.0)

        # merged heads: concat((s, l)) @ W.T + b == s @ W_s + l @ W_l + b,
        # with mean and log-var columns packed side by side -> (B, 2L).
        zmv = (jnp.dot(s.astype(jnp.bfloat16), wslice(w_ref, "w_head_s"),
                       preferred_element_type=jnp.float32)
               + jnp.dot(l.astype(jnp.bfloat16), wslice(w_ref, "w_head_l"),
                         preferred_element_type=jnp.float32)
               + wslice(w_ref, "b_head"))
        z = zmv[:, 0:L] + jnp.exp(0.5 * zmv[:, L:2 * L]) * eps_v
        out_ref[...] = jnp.concatenate([zmv, z], axis=1)   # [z_mean | z_log_var | z]

    flops = 2 * B * (4 * NI * QO + QO * 10 + NS * 20 + 20 * 10 + 2 * 10 * 2 * L)
    vmem = pl.BlockSpec(memory_space=pltpu.MemorySpace.VMEM)
    out = pl.pallas_call(
        kernel,
        out_shape=jax.ShapeDtypeStruct((B, 3 * L), jnp.float32),
        in_specs=[vmem, vmem],
        out_specs=vmem,
        cost_estimate=pl.CostEstimate(
            flops=flops, transcendentals=B * L,
            bytes_accessed=slab.size * 2 + act.size * 4 + B * 3 * L * 4),
    )(act, slab)

    return out[:, 0:L], out[:, L:2 * L], out[:, 2 * L:3 * L], None


# --------------------------------------------------------------------------
# Deterministic parameter initialization (PyTorch shapes)
# --------------------------------------------------------------------------
def init_params(key, latent_dims, distance, channels):
    Pp = int(0.5 * (distance + 3))
    F = 10 * Pp * Pp
    shapes = {
        "conv_w": (10, channels, 2, 2), "conv_b": (10,),
        "linear_w": (10, F), "linear_b": (10,),
        "l1_w": (20, 4 * distance), "l1_b": (20,),
        "l2_w": (10, 20), "l2_b": (10,),
        "mean_w": (latent_dims, 20), "mean_b": (latent_dims,),
        "logvar_w": (latent_dims, 20), "logvar_b": (latent_dims,),
    }
    params = {}
    for i, name in enumerate(sorted(shapes)):
        k = jax.random.fold_in(key, i)
        params[name] = 0.1 * jax.random.normal(k, shapes[name], jnp.float32)
    return params


# --------------------------------------------------------------------------
# Pure-JAX reference mirroring the PyTorch module (eval mode)
# --------------------------------------------------------------------------
def _reference_forward(params, x0, x1, eps):
    B = x0.shape[0]
    xp = jnp.pad(x0, ((0, 0), (0, 0), (1, 1), (1, 1)), mode="wrap")
    s = jax.lax.conv_general_dilated(
        xp, params["conv_w"], window_strides=(1, 1), padding="VALID",
        dimension_numbers=("NCHW", "OIHW", "NCHW"))
    s = jax.nn.relu(s + params["conv_b"].reshape(1, -1, 1, 1))
    s = jax.lax.reduce_window(
        s, -jnp.inf, jax.lax.max, window_dimensions=(1, 1, 2, 2),
        window_strides=(1, 1, 2, 2), padding=((0, 0), (0, 0), (1, 1), (1, 1)))
    s = jax.nn.relu(s.reshape(B, -1) @ params["linear_w"].T + params["linear_b"])
    l = jax.nn.relu(x1 @ params["l1_w"].T + params["l1_b"])
    l = jax.nn.relu(l @ params["l2_w"].T + params["l2_b"])
    sl = jnp.concatenate([s, l], axis=1)
    zm = sl @ params["mean_w"].T + params["mean_b"]
    zv = sl @ params["logvar_w"].T + params["logvar_b"]
    return zm, zv, zm + jnp.exp(0.5 * zv) * eps


if __name__ == "__main__":
    latent_dims, distance, channels, batch = 8, 5, 4, 2

    key = jax.random.PRNGKey(0)
    kp, kx0, kx1, keps = jax.random.split(key, 4)
    params = init_params(kp, latent_dims, distance, channels)

    # x is the tuple input of the PyTorch module: (image NCHW, syndrome vector)
    x0 = jax.random.normal(kx0, (batch, channels, distance, distance), jnp.float32)
    x1 = jax.random.normal(kx1, (batch, 4 * distance), jnp.float32)
    # reparameterisation noise (stands in for torch.distributions.Normal(0,1).sample)
    eps = jax.random.normal(keps, (batch, latent_dims), jnp.float32)

    slab = pack_params(params, latent_dims, distance, channels)   # one-time packing
    z_mean, z_log_var, z, _ = encoder_forward(slab, x0, x1, eps)
    jax.block_until_ready((z_mean, z_log_var, z))

    assert z_mean.shape == (batch, latent_dims)
    assert z_log_var.shape == (batch, latent_dims)
    assert z.shape == (batch, latent_dims)

    zm_ref, zv_ref, z_ref = _reference_forward(params, x0, x1, eps)
    for got, ref in ((z_mean, zm_ref), (z_log_var, zv_ref), (z, z_ref)):
        np.testing.assert_allclose(np.asarray(got), np.asarray(ref),
                                   rtol=2e-2, atol=2e-2)

    print("KERNEL_OK")
</pallas_src>

<mosaic_0001>
module attributes {stable_mosaic.version = 11 : i64} {
  func.func @kernel(%arg0: memref<2x128xf32, #tpu.memory_space<vmem>>, %arg1: memref<784x160xbf16, #tpu.memory_space<vmem>>, %arg2: memref<2x24xf32, #tpu.memory_space<vmem>>) attributes {dimension_semantics = [], scalar_prefetch = 0 : i64, scratch_operands = 0 : i64, tpu.core_type = #tpu.core_type<tc>} {
    %c0 = arith.constant 0 : index
    %c0_0 = arith.constant 0 : index
    %0 = vector.load %arg0[%c0, %c0_0] : memref<2x128xf32, #tpu.memory_space<vmem>>, vector<2x128xf32>
    %1 = vector.extract_strided_slice %0 {offsets = [0, 0], sizes = [2, 100], strides = [1, 1]} : vector<2x128xf32> to vector<2x100xf32>
    %2 = arith.truncf %1 : vector<2x100xf32> to vector<2x100xbf16>
    %3 = vector.extract_strided_slice %0 {offsets = [0, 100], sizes = [2, 20], strides = [1, 1]} : vector<2x128xf32> to vector<2x20xf32>
    %4 = arith.truncf %3 : vector<2x20xf32> to vector<2x20xbf16>
    %5 = vector.extract_strided_slice %0 {offsets = [0, 120], sizes = [2, 8], strides = [1, 1]} : vector<2x128xf32> to vector<2x8xf32>
    %c0_1 = arith.constant 0 : index
    %c0_2 = arith.constant 0 : index
    %6 = vector.load %arg1[%c0_1, %c0_2] : memref<784x160xbf16, #tpu.memory_space<vmem>>, vector<100x160xbf16>
    %cst = arith.constant dense<0.000000e+00> : vector<2x160xf32>
    %7 = tpu.matmul %2, %6, %cst {dimension_numbers = #tpu.dot_dimension_numbers<[1], [0], [0], [1], [0, 0, 1, 1], [], []>} : vector<2x100xbf16>, vector<100x160xbf16>, vector<2x160xf32> -> vector<2x160xf32>
    %c112 = arith.constant 112 : index
    %c0_3 = arith.constant 0 : index
    %8 = vector.load %arg1[%c112, %c0_3] : memref<784x160xbf16, #tpu.memory_space<vmem>>, vector<100x160xbf16>
    %cst_4 = arith.constant dense<0.000000e+00> : vector<2x160xf32>
    %9 = tpu.matmul %2, %8, %cst_4 {dimension_numbers = #tpu.dot_dimension_numbers<[1], [0], [0], [1], [0, 0, 1, 1], [], []>} : vector<2x100xbf16>, vector<100x160xbf16>, vector<2x160xf32> -> vector<2x160xf32>
    %c224 = arith.constant 224 : index
    %c0_5 = arith.constant 0 : index
    %10 = vector.load %arg1[%c224, %c0_5] : memref<784x160xbf16, #tpu.memory_space<vmem>>, vector<100x160xbf16>
    %cst_6 = arith.constant dense<0.000000e+00> : vector<2x160xf32>
    %11 = tpu.matmul %2, %10, %cst_6 {dimension_numbers = #tpu.dot_dimension_numbers<[1], [0], [0], [1], [0, 0, 1, 1], [], []>} : vector<2x100xbf16>, vector<100x160xbf16>, vector<2x160xf32> -> vector<2x160xf32>
    %c336 = arith.constant 336 : index
    %c0_7 = arith.constant 0 : index
    %12 = vector.load %arg1[%c336, %c0_7] : memref<784x160xbf16, #tpu.memory_space<vmem>>, vector<100x160xbf16>
    %cst_8 = arith.constant dense<0.000000e+00> : vector<2x160xf32>
    %13 = tpu.matmul %2, %12, %cst_8 {dimension_numbers = #tpu.dot_dimension_numbers<[1], [0], [0], [1], [0, 0, 1, 1], [], []>} : vector<2x100xbf16>, vector<100x160xbf16>, vector<2x160xf32> -> vector<2x160xf32>
    %14 = arith.maximumf %7, %9 : vector<2x160xf32>
    %15 = arith.maximumf %11, %13 : vector<2x160xf32>
    %16 = arith.maximumf %14, %15 : vector<2x160xf32>
    %c448 = arith.constant 448 : index
    %c0_9 = arith.constant 0 : index
    %17 = vector.load %arg1[%c448, %c0_9] : memref<784x160xbf16, #tpu.memory_space<vmem>>, vector<1x160xbf16>
    %18 = arith.extf %17 : vector<1x160xbf16> to vector<1x160xf32>
    %19 = vector.broadcast %18 : vector<1x160xf32> to vector<2x160xf32>
    %20 = arith.addf %16, %19 : vector<2x160xf32>
    %cst_10 = arith.constant 0.000000e+00 : f32
    %21 = vector.broadcast %cst_10 : f32 to vector<2x160xf32>
    %22 = arith.maximumf %20, %21 : vector<2x160xf32>
    %23 = arith.truncf %22 : vector<2x160xf32> to vector<2x160xbf16>
    %c464 = arith.constant 464 : index
    %c0_11 = arith.constant 0 : index
    %24 = vector.load %arg1[%c464, %c0_11] : memref<784x160xbf16, #tpu.memory_space<vmem>>, vector<160x10xbf16>
    %cst_12 = arith.constant dense<0.000000e+00> : vector<2x10xf32>
    %25 = tpu.matmul %23, %24, %cst_12 {dimension_numbers = #tpu.dot_dimension_numbers<[1], [0], [0], [1], [0, 0, 1, 1], [], []>} : vector<2x160xbf16>, vector<160x10xbf16>, vector<2x10xf32> -> vector<2x10xf32>
    %c624 = arith.constant 624 : index
    %c0_13 = arith.constant 0 : index
    %26 = vector.load %arg1[%c624, %c0_13] : memref<784x160xbf16, #tpu.memory_space<vmem>>, vector<1x10xbf16>
    %27 = arith.extf %26 : vector<1x10xbf16> to vector<1x10xf32>
    %28 = vector.broadcast %27 : vector<1x10xf32> to vector<2x10xf32>
    %29 = arith.addf %25, %28 : vector<2x10xf32>
    %cst_14 = arith.constant 0.000000e+00 : f32
    %30 = vector.broadcast %cst_14 : f32 to vector<2x10xf32>
    %31 = arith.maximumf %29, %30 : vector<2x10xf32>
    %c640 = arith.constant 640 : index
    %c0_15 = arith.constant 0 : index
    %32 = vector.load %arg1[%c640, %c0_15] : memref<784x160xbf16, #tpu.memory_space<vmem>>, vector<20x20xbf16>
    %cst_16 = arith.constant dense<0.000000e+00> : vector<2x20xf32>
    %33 = tpu.matmul %4, %32, %cst_16 {dimension_numbers = #tpu.dot_dimension_numbers<[1], [0], [0], [1], [0, 0, 1, 1], [], []>} : vector<2x20xbf16>, vector<20x20xbf16>, vector<2x20xf32> -> vector<2x20xf32>
    %c672 = arith.constant 672 : index
    %c0_17 = arith.constant 0 : index
    %34 = vector.load %arg1[%c672, %c0_17] : memref<784x160xbf16, #tpu.memory_space<vmem>>, vector<1x20xbf16>
    %35 = arith.extf %34 : vector<1x20xbf16> to vector<1x20xf32>
    %36 = vector.broadcast %35 : vector<1x20xf32> to vector<2x20xf32>
    %37 = arith.addf %33, %36 : vector<2x20xf32>
    %cst_18 = arith.constant 0.000000e+00 : f32
    %38 = vector.broadcast %cst_18 : f32 to vector<2x20xf32>
    %39 = arith.maximumf %37, %38 : vector<2x20xf32>
    %40 = arith.truncf %39 : vector<2x20xf32> to vector<2x20xbf16>
    %c688 = arith.constant 688 : index
    %c0_19 = arith.constant 0 : index
    %41 = vector.load %arg1[%c688, %c0_19] : memref<784x160xbf16, #tpu.memory_space<vmem>>, vector<20x10xbf16>
    %cst_20 = arith.constant dense<0.000000e+00> : vector<2x10xf32>
    %42 = tpu.matmul %40, %41, %cst_20 {dimension_numbers = #tpu.dot_dimension_numbers<[1], [0], [0], [1], [0, 0, 1, 1], [], []>} : vector<2x20xbf16>, vector<20x10xbf16>, vector<2x10xf32> -> vector<2x10xf32>
    %c720 = arith.constant 720 : index
    %c0_21 = arith.constant 0 : index
    %43 = vector.load %arg1[%c720, %c0_21] : memref<784x160xbf16, #tpu.memory_space<vmem>>, vector<1x10xbf16>
    %44 = arith.extf %43 : vector<1x10xbf16> to vector<1x10xf32>
    %45 = vector.broadcast %44 : vector<1x10xf32> to vector<2x10xf32>
    %46 = arith.addf %42, %45 : vector<2x10xf32>
    %cst_22 = arith.constant 0.000000e+00 : f32
    %47 = vector.broadcast %cst_22 : f32 to vector<2x10xf32>
    %48 = arith.maximumf %46, %47 : vector<2x10xf32>
    %49 = arith.truncf %31 : vector<2x10xf32> to vector<2x10xbf16>
    %c736 = arith.constant 736 : index
    %c0_23 = arith.constant 0 : index
    %50 = vector.load %arg1[%c736, %c0_23] : memref<784x160xbf16, #tpu.memory_space<vmem>>, vector<10x16xbf16>
    %cst_24 = arith.constant dense<0.000000e+00> : vector<2x16xf32>
    %51 = tpu.matmul %49, %50, %cst_24 {dimension_numbers = #tpu.dot_dimension_numbers<[1], [0], [0], [1], [0, 0, 1, 1], [], []>} : vector<2x10xbf16>, vector<10x16xbf16>, vector<2x16xf32> -> vector<2x16xf32>
    %52 = arith.truncf %48 : vector<2x10xf32> to vector<2x10xbf16>
    %c752 = arith.constant 752 : index
    %c0_25 = arith.constant 0 : index
    %53 = vector.load %arg1[%c752, %c0_25] : memref<784x160xbf16, #tpu.memory_space<vmem>>, vector<10x16xbf16>
    %cst_26 = arith.constant dense<0.000000e+00> : vector<2x16xf32>
    %54 = tpu.matmul %52, %53, %cst_26 {dimension_numbers = #tpu.dot_dimension_numbers<[1], [0], [0], [1], [0, 0, 1, 1], [], []>} : vector<2x10xbf16>, vector<10x16xbf16>, vector<2x16xf32> -> vector<2x16xf32>
    %55 = arith.addf %51, %54 : vector<2x16xf32>
    %c768 = arith.constant 768 : index
    %c0_27 = arith.constant 0 : index
    %56 = vector.load %arg1[%c768, %c0_27] : memref<784x160xbf16, #tpu.memory_space<vmem>>, vector<1x16xbf16>
    %57 = arith.extf %56 : vector<1x16xbf16> to vector<1x16xf32>
    %58 = vector.broadcast %57 : vector<1x16xf32> to vector<2x16xf32>
    %59 = arith.addf %55, %58 : vector<2x16xf32>
    %60 = vector.extract_strided_slice %59 {offsets = [0, 0], sizes = [2, 8], strides = [1, 1]} : vector<2x16xf32> to vector<2x8xf32>
    %61 = vector.extract_strided_slice %59 {offsets = [0, 8], sizes = [2, 8], strides = [1, 1]} : vector<2x16xf32> to vector<2x8xf32>
    %cst_28 = arith.constant 5.000000e-01 : f32
    %62 = vector.broadcast %cst_28 : f32 to vector<2x8xf32>
    %63 = arith.mulf %62, %61 : vector<2x8xf32>
    %64 = math.exp %63 : vector<2x8xf32>
    %65 = arith.mulf %64, %5 : vector<2x8xf32>
    %66 = arith.addf %60, %65 : vector<2x8xf32>
    %67 = tpu.concatenate %59, %66 in 1 : vector<2x16xf32>, vector<2x8xf32> -> vector<2x24xf32>
    %c0_29 = arith.constant 0 : index
    %c0_30 = arith.constant 0 : index
    %68 = vector.load %arg2[%c0_29, %c0_30] : memref<2x24xf32, #tpu.memory_space<vmem>>, vector<2x24xf32>
    tpu.vector_store %arg2[%c0_29, %c0_30], %67 {strides = array<i32>} : memref<2x24xf32, #tpu.memory_space<vmem>>, vector<2x24xf32>,
    return
  }
}

</mosaic_0001>

<llo_original>
// kernel: encoder_forward.1
$region0: #{encoder_forward.1}
  #allocation0 [shape = 'u32[]', space=smem, size = 0x4, offset = 0x4, fixed_abs, tag = 'smem constant byte address 0x4 - core index']
  #allocation1 [shape = 'u32[144,128]{1,0:T(1,128)}', space=vmem, size = 0x12000, scoped, tag = 'internal scratch']
  %s0 = inlined_call_operand.vmem [shape: f32[2,128], index: 0, kind: input, shape index: {}]
  %s1 = inlined_call_operand.vmem [shape: bf16[784,160], index: 1, kind: input, shape index: {}]
  %s2 = inlined_call_operand.vmem [shape: f32[2,24], index: 2, kind: output, shape index: {}]
  %s3 = sld [smem:[#allocation0]]
  $region18: #{encoder_forward.1} parent=0
    _
  %s5 = ssub.s32 1, %s3
  %s6 = scalar_select 0, %s5, %s3
  // Predicated region
  $region2: #{encoder_forward.1} parent=0 // pred_check
    _
  $region3: #{encoder_forward.1} parent=0 // pred_check_branch
    %8 = sbr.rel (0) target = $region5
  $region4: #{encoder_forward.1} parent=0 // pred_region
    _
  $region5: #{encoder_forward.1} parent=0 // pred_fallthru
    _
  // Predicated region
  $region6: #{encoder_forward.1} parent=0 // pred_check
    _
  $region7: #{encoder_forward.1} parent=0 // pred_check_branch
    %10 = sbr.rel (0) target = $region9
  $region8: #{encoder_forward.1} parent=0 // pred_region
    _
  $region9: #{encoder_forward.1} parent=0 // pred_fallthru
    _
  %v12 = vld [vmem:[%s0] sm:$0x3]
  %v13 = vpack.c.bf16 %v12, %v12
  %v14 = vld [vmem:[%s1] sm:$0xff]
  %v15 = vld [vmem:[%s1 + $0x8] sm:$0xff]
  %v16 = vld [vmem:[%s1 + $0x10] sm:$0xff]
  %v17 = vld [vmem:[%s1 + $0x18] sm:$0xff]
  %v18 = vld [vmem:[%s1 + $0x20] sm:$0xff]
  %v19 = vld [vmem:[%s1 + $0x28] sm:$0xff]
  %v20 = vld [vmem:[%s1 + $0x30] sm:$0xff]
  %v21 = vld [vmem:[%s1 + $0x38] sm:$0xff]
  %v22 = vld [vmem:[%s1 + $0x40] sm:$0xff]
  %v23 = vld [vmem:[%s1 + $0x48] sm:$0xff]
  %v24 = vld [vmem:[%s1 + $0x50] sm:$0xff]
  %v25 = vld [vmem:[%s1 + $0x58] sm:$0xff]
  %v26 = vld [vmem:[%s1 + $0x60] sm:$0x33]
  %v40 = vunpack.c.l.b16 %v14
  %v41 = vunpack.c.h.b16 %v14
  %v42 = vunpack.c.l.b16 %v15
  %v43 = vunpack.c.h.b16 %v15
  %v44 = vunpack.c.l.b16 %v16
  %v45 = vunpack.c.h.b16 %v16
  %v46 = vunpack.c.l.b16 %v17
  %v47 = vunpack.c.h.b16 %v17
  %v48 = vunpack.c.l.b16 %v18
  %v49 = vunpack.c.h.b16 %v18
  %v50 = vunpack.c.l.b16 %v19
  %v51 = vunpack.c.h.b16 %v19
  %v52 = vunpack.c.l.b16 %v20
  %v53 = vunpack.c.h.b16 %v20
  %v54 = vunpack.c.l.b16 %v21
  %v55 = vunpack.c.h.b16 %v21
  %v56 = vunpack.c.l.b16 %v22
  %v57 = vunpack.c.h.b16 %v22
  %v58 = vunpack.c.l.b16 %v23
  %v59 = vunpack.c.h.b16 %v23
  %v60 = vunpack.c.l.b16 %v24
  %v61 = vunpack.c.h.b16 %v24
  %v62 = vunpack.c.l.b16 %v25
  %v63 = vunpack.c.h.b16 %v25
  %v64 = vunpack.c.l.b16 %v26
  %v65 = vunpack.c.h.b16 %v26
  %v66 = vpack.c.b16 %v42, %v40
  %v67 = vpack.c.b16 %v43, %v41
  %v68 = vpack.c.b16 %v46, %v44
  %v69 = vpack.c.b16 %v47, %v45
  %v70 = vpack.c.b16 %v50, %v48
  %v71 = vpack.c.b16 %v51, %v49
  %v72 = vpack.c.b16 %v54, %v52
  %v73 = vpack.c.b16 %v55, %v53
  %v74 = vpack.c.b16 %v58, %v56
  %v75 = vpack.c.b16 %v59, %v57
  %v76 = vpack.c.b16 %v62, %v60
  %v77 = vpack.c.b16 %v63, %v61
  %v78 = vpack.c.b16 %v64, %v64
  %v79 = vpack.c.b16 %v65, %v65
  %vm92 = vcmask 818176
  %v94 = vsel %vm92, %v13, 0
  %vm96 = vcmask 1041408
  %v98 = vsel %vm96, %v78, 0
  %v101 = vsel %vm96, %v79, 0
  %103 = vmatprep.subr.bf16.mxu0 0
  %104 = vmatpush1.bf16.msra.mxu0 0
  %105 = vmatprep.subr.bf16.mxu0 %v101
  %106 = vmatpush1.bf16.msra.mxu0 %v98
  %107 = vmatprep.subr.bf16.mxu0 %v77
  %108 = vmatpush1.bf16.msra.mxu0 %v76
  %109 = vmatprep.subr.bf16.mxu0 %v75
  %110 = vmatpush1.bf16.msra.mxu0 %v74
  %111 = vmatprep.subr.bf16.mxu0 %v73
  %112 = vmatpush1.bf16.msra.mxu0 %v72
  %113 = vmatprep.subr.bf16.mxu0 %v71
  %114 = vmatpush1.bf16.msra.mxu0 %v70
  %115 = vmatprep.subr.bf16.mxu0 %v69
  %116 = vmatpush1.bf16.msra.mxu0 %v68
  %117 = vmatprep.subr.bf16.mxu0 %v67
  %118 = vmatpush1.bf16.msra.mxu0 %v66
  %119 = vmatprep.subr.bf16.mxu0 0
  %120 = vmatpush2.bf16.msra.mxu0 0
  %121 = vmatprep.subr.bf16.mxu0 0
  %122 = vmatpush2.bf16.msra.mxu0 0
  %123 = vmatprep.subr.bf16.mxu0 0
  %124 = vmatpush2.bf16.msra.mxu0 0
  %125 = vmatprep.subr.bf16.mxu0 0
  %126 = vmatpush2.bf16.msra.mxu0 0
  %127 = vmatprep.subr.bf16.mxu0 0
  %128 = vmatpush2.bf16.msra.mxu0 0
  %129 = vmatprep.subr.bf16.mxu0 0
  %130 = vmatpush2.bf16.msra.mxu0 0
  %131 = vmatprep.subr.bf16.mxu0 0
  %132 = vmatpush2.bf16.msra.mxu0 0
  %133 = vmatprep.subr.bf16.mxu0 0
  %134 = vmatpush2.bf16.msra.mxu0 0
  %135 = vmatprep.mubr.bf16.mxu0 0
  %136 = vmatmul.mubr.bf16.gmra.mxu0 %v94
  %v137 = vpop.f32.mrf.mxu0
  %v138 = vadd.f32 0.0, %v137
  %v139 = vpop.f32.mrf.mxu0
  %v140 = vadd.f32 0.0, %v139
  %v141 = vpop.f32.mrf.mxu0
  %v142 = vpop.f32.mrf.mxu0
  %143 = vdwg.mxu0
  %v144 = vld [vmem:[%s1 + $0x70] sm:$0xff]
  %v145 = vld [vmem:[%s1 + $0x78] sm:$0xff]
  %v146 = vld [vmem:[%s1 + $0x80] sm:$0xff]
  %v147 = vld [vmem:[%s1 + $0x88] sm:$0xff]
  %v148 = vld [vmem:[%s1 + $0x90] sm:$0xff]
  %v149 = vld [vmem:[%s1 + $0x98] sm:$0xff]
  %v150 = vld [vmem:[%s1 + $0xa0] sm:$0xff]
  %v151 = vld [vmem:[%s1 + $0xa8] sm:$0xff]
  %v152 = vld [vmem:[%s1 + $0xb0] sm:$0xff]
  %v153 = vld [vmem:[%s1 + $0xb8] sm:$0xff]
  %v154 = vld [vmem:[%s1 + $0xc0] sm:$0xff]
  %v155 = vld [vmem:[%s1 + $0xc8] sm:$0xff]
  %v156 = vld [vmem:[%s1 + $0xd0] sm:$0x33]
  %v170 = vunpack.c.l.b16 %v144
  %v171 = vunpack.c.h.b16 %v144
  %v172 = vunpack.c.l.b16 %v145
  %v173 = vunpack.c.h.b16 %v145
  %v174 = vunpack.c.l.b16 %v146
  %v175 = vunpack.c.h.b16 %v146
  %v176 = vunpack.c.l.b16 %v147
  %v177 = vunpack.c.h.b16 %v147
  %v178 = vunpack.c.l.b16 %v148
  %v179 = vunpack.c.h.b16 %v148
  %v180 = vunpack.c.l.b16 %v149
  %v181 = vunpack.c.h.b16 %v149
  %v182 = vunpack.c.l.b16 %v150
  %v183 = vunpack.c.h.b16 %v150
  %v184 = vunpack.c.l.b16 %v151
  %v185 = vunpack.c.h.b16 %v151
  %v186 = vunpack.c.l.b16 %v152
  %v187 = vunpack.c.h.b16 %v152
  %v188 = vunpack.c.l.b16 %v153
  %v189 = vunpack.c.h.b16 %v153
  %v190 = vunpack.c.l.b16 %v154
  %v191 = vunpack.c.h.b16 %v154
  %v192 = vunpack.c.l.b16 %v155
  %v193 = vunpack.c.h.b16 %v155
  %v194 = vunpack.c.l.b16 %v156
  %v195 = vunpack.c.h.b16 %v156
  %v196 = vpack.c.b16 %v172, %v170
  %v197 = vpack.c.b16 %v173, %v171
  %v198 = vpack.c.b16 %v176, %v174
  %v199 = vpack.c.b16 %v177, %v175
  %v200 = vpack.c.b16 %v180, %v178
  %v201 = vpack.c.b16 %v181, %v179
  %v202 = vpack.c.b16 %v184, %v182
  %v203 = vpack.c.b16 %v185, %v183
  %v204 = vpack.c.b16 %v188, %v186
  %v205 = vpack.c.b16 %v189, %v187
  %v206 = vpack.c.b16 %v192, %v190
  %v207 = vpack.c.b16 %v193, %v191
  %v208 = vpack.c.b16 %v194, %v194
  %v209 = vpack.c.b16 %v195, %v195
  %v223 = vsel %vm96, %v208, 0
  %v226 = vsel %vm96, %v209, 0
  %228 = vmatprep.subr.bf16.mxu0 0
  %229 = vmatpush1.bf16.msra.mxu0 0
  %230 = vmatprep.subr.bf16.mxu0 %v226
  %231 = vmatpush1.bf16.msra.mxu0 %v223
  %232 = vmatprep.subr.bf16.mxu0 %v207
  %233 = vmatpush1.bf16.msra.mxu0 %v206
  %234 = vmatprep.subr.bf16.mxu0 %v205
  %235 = vmatpush1.bf16.msra.mxu0 %v204
  %236 = vmatprep.subr.bf16.mxu0 %v203
  %237 = vmatpush1.bf16.msra.mxu0 %v202
  %238 = vmatprep.subr.bf16.mxu0 %v201
  %239 = vmatpush1.bf16.msra.mxu0 %v200
  %240 = vmatprep.subr.bf16.mxu0 %v199
  %241 = vmatpush1.bf16.msra.mxu0 %v198
  %242 = vmatprep.subr.bf16.mxu0 %v197
  %243 = vmatpush1.bf16.msra.mxu0 %v196
  %244 = vmatprep.subr.bf16.mxu0 0
  %245 = vmatpush2.bf16.msra.mxu0 0
  %246 = vmatprep.subr.bf16.mxu0 0
  %247 = vmatpush2.bf16.msra.mxu0 0
  %248 = vmatprep.subr.bf16.mxu0 0
  %249 = vmatpush2.bf16.msra.mxu0 0
  %250 = vmatprep.subr.bf16.mxu0 0
  %251 = vmatpush2.bf16.msra.mxu0 0
  %252 = vmatprep.subr.bf16.mxu0 0
  %253 = vmatpush2.bf16.msra.mxu0 0
  %254 = vmatprep.subr.bf16.mxu0 0
  %255 = vmatpush2.bf16.msra.mxu0 0
  %256 = vmatprep.subr.bf16.mxu0 0
  %257 = vmatpush2.bf16.msra.mxu0 0
  %258 = vmatprep.subr.bf16.mxu0 0
  %259 = vmatpush2.bf16.msra.mxu0 0
  %260 = vmatprep.mubr.bf16.mxu0 0
  %261 = vmatmul.mubr.bf16.gmra.mxu0 %v94
  %v262 = vpop.f32.mrf.mxu0
  %v263 = vadd.f32 0.0, %v262
  %v264 = vpop.f32.mrf.mxu0
  %v265 = vadd.f32 0.0, %v264
  %v266 = vpop.f32.mrf.mxu0
  %v267 = vpop.f32.mrf.mxu0
  %268 = vdwg.mxu0
  %v269 = vld [vmem:[%s1 + $0xe0] sm:$0xff]
  %v270 = vld [vmem:[%s1 + $0xe8] sm:$0xff]
  %v271 = vld [vmem:[%s1 + $0xf0] sm:$0xff]
  %v272 = vld [vmem:[%s1 + $0xf8] sm:$0xff]
  %v273 = vld [vmem:[%s1 + $0x100] sm:$0xff]
  %v274 = vld [vmem:[%s1 + $0x108] sm:$0xff]
  %v275 = vld [vmem:[%s1 + $0x110] sm:$0xff]
  %v276 = vld [vmem:[%s1 + $0x118] sm:$0xff]
  %v277 = vld [vmem:[%s1 + $0x120] sm:$0xff]
  %v278 = vld [vmem:[%s1 + $0x128] sm:$0xff]
  %v279 = vld [vmem:[%s1 + $0x130] sm:$0xff]
  %v280 = vld [vmem:[%s1 + $0x138] sm:$0xff]
  %v281 = vld [vmem:[%s1 + $0x140] sm:$0x33]
  %v295 = vunpack.c.l.b16 %v269
  %v296 = vunpack.c.h.b16 %v269
  %v297 = vunpack.c.l.b16 %v270
  %v298 = vunpack.c.h.b16 %v270
  %v299 = vunpack.c.l.b16 %v271
  %v300 = vunpack.c.h.b16 %v271
  %v301 = vunpack.c.l.b16 %v272
  %v302 = vunpack.c.h.b16 %v272
  %v303 = vunpack.c.l.b16 %v273
  %v304 = vunpack.c.h.b16 %v273
  %v305 = vunpack.c.l.b16 %v274
  %v306 = vunpack.c.h.b16 %v274
  %v307 = vunpack.c.l.b16 %v275
  %v308 = vunpack.c.h.b16 %v275
  %v309 = vunpack.c.l.b16 %v276
  %v310 = vunpack.c.h.b16 %v276
  %v311 = vunpack.c.l.b16 %v277
  %v312 = vunpack.c.h.b16 %v277
  %v313 = vunpack.c.l.b16 %v278
  %v314 = vunpack.c.h.b16 %v278
  %v315 = vunpack.c.l.b16 %v279
  %v316 = vunpack.c.h.b16 %v279
  %v317 = vunpack.c.l.b16 %v280
  %v318 = vunpack.c.h.b16 %v280
  %v319 = vunpack.c.l.b16 %v281
  %v320 = vunpack.c.h.b16 %v281
  %v321 = vpack.c.b16 %v297, %v295
  %v322 = vpack.c.b16 %v298, %v296
  %v323 = vpack.c.b16 %v301, %v299
  %v324 = vpack.c.b16 %v302, %v300
  %v325 = vpack.c.b16 %v305, %v303
  %v326 = vpack.c.b16 %v306, %v304
  %v327 = vpack.c.b16 %v309, %v307
  %v328 = vpack.c.b16 %v310, %v308
  %v329 = vpack.c.b16 %v313, %v311
  %v330 = vpack.c.b16 %v314, %v312
  %v331 = vpack.c.b16 %v317, %v315
  %v332 = vpack.c.b16 %v318, %v316
  %v333 = vpack.c.b16 %v319, %v319
  %v334 = vpack.c.b16 %v320, %v320
  %v348 = vsel %vm96, %v333, 0
  %v351 = vsel %vm96, %v334, 0
  %353 = vmatprep.subr.bf16.mxu0 0
  %354 = vmatpush1.bf16.msra.mxu0 0
  %355 = vmatprep.subr.bf16.mxu0 %v351
  %356 = vmatpush1.bf16.msra.mxu0 %v348
  %357 = vmatprep.subr.bf16.mxu0 %v332
  %358 = vmatpush1.bf16.msra.mxu0 %v331
  %359 = vmatprep.subr.bf16.mxu0 %v330
  %360 = vmatpush1.bf16.msra.mxu0 %v329
  %361 = vmatprep.subr.bf16.mxu0 %v328
  %362 = vmatpush1.bf16.msra.mxu0 %v327
  %363 = vmatprep.subr.bf16.mxu0 %v326
  %364 = vmatpush1.bf16.msra.mxu0 %v325
  %365 = vmatprep.subr.bf16.mxu0 %v324
  %366 = vmatpush1.bf16.msra.mxu0 %v323
  %367 = vmatprep.subr.bf16.mxu0 %v322
  %368 = vmatpush1.bf16.msra.mxu0 %v321
  %369 = vmatprep.subr.bf16.mxu0 0
  %370 = vmatpush2.bf16.msra.mxu0 0
  %371 = vmatprep.subr.bf16.mxu0 0
  %372 = vmatpush2.bf16.msra.mxu0 0
  %373 = vmatprep.subr.bf16.mxu0 0
  %374 = vmatpush2.bf16.msra.mxu0 0
  %375 = vmatprep.subr.bf16.mxu0 0
  %376 = vmatpush2.bf16.msra.mxu0 0
  %377 = vmatprep.subr.bf16.mxu0 0
  %378 = vmatpush2.bf16.msra.mxu0 0
  %379 = vmatprep.subr.bf16.mxu0 0
  %380 = vmatpush2.bf16.msra.mxu0 0
  %381 = vmatprep.subr.bf16.mxu0 0
  %382 = vmatpush2.bf16.msra.mxu0 0
  %383 = vmatprep.subr.bf16.mxu0 0
  %384 = vmatpush2.bf16.msra.mxu0 0
  %385 = vmatprep.mubr.bf16.mxu0 0
  %386 = vmatmul.mubr.bf16.gmra.mxu0 %v94
  %v387 = vpop.f32.mrf.mxu0
  %v388 = vadd.f32 0.0, %v387
  %v389 = vpop.f32.mrf.mxu0
  %v390 = vadd.f32 0.0, %v389
  %v391 = vpop.f32.mrf.mxu0
  %v392 = vpop.f32.mrf.mxu0
  %393 = vdwg.mxu0
  %v394 = vld [vmem:[%s1 + $0x150] sm:$0xff]
  %v395 = vld [vmem:[%s1 + $0x158] sm:$0xff]
  %v396 = vld [vmem:[%s1 + $0x160] sm:$0xff]
  %v397 = vld [vmem:[%s1 + $0x168] sm:$0xff]
  %v398 = vld [vmem:[%s1 + $0x170] sm:$0xff]
  %v399 = vld [vmem:[%s1 + $0x178] sm:$0xff]
  %v400 = vld [vmem:[%s1 + $0x180] sm:$0xff]
  %v401 = vld [vmem:[%s1 + $0x188] sm:$0xff]
  %v402 = vld [vmem:[%s1 + $0x190] sm:$0xff]
  %v403 = vld [vmem:[%s1 + $0x198] sm:$0xff]
  %v404 = vld [vmem:[%s1 + $0x1a0] sm:$0xff]
  %v405 = vld [vmem:[%s1 + $0x1a8] sm:$0xff]
  %v406 = vld [vmem:[%s1 + $0x1b0] sm:$0x33]
  %v420 = vunpack.c.l.b16 %v394
  %v421 = vunpack.c.h.b16 %v394
  %v422 = vunpack.c.l.b16 %v395
  %v423 = vunpack.c.h.b16 %v395
  %v424 = vunpack.c.l.b16 %v396
  %v425 = vunpack.c.h.b16 %v396
  %v426 = vunpack.c.l.b16 %v397
  %v427 = vunpack.c.h.b16 %v397
  %v428 = vunpack.c.l.b16 %v398
  %v429 = vunpack.c.h.b16 %v398
  %v430 = vunpack.c.l.b16 %v399
  %v431 = vunpack.c.h.b16 %v399
  %v432 = vunpack.c.l.b16 %v400
  %v433 = vunpack.c.h.b16 %v400
  %v434 = vunpack.c.l.b16 %v401
  %v435 = vunpack.c.h.b16 %v401
  %v436 = vunpack.c.l.b16 %v402
  %v437 = vunpack.c.h.b16 %v402
  %v438 = vunpack.c.l.b16 %v403
  %v439 = vunpack.c.h.b16 %v403
  %v440 = vunpack.c.l.b16 %v404
  %v441 = vunpack.c.h.b16 %v404
  %v442 = vunpack.c.l.b16 %v405
  %v443 = vunpack.c.h.b16 %v405
  %v444 = vunpack.c.l.b16 %v406
  %v445 = vunpack.c.h.b16 %v406
  %v446 = vpack.c.b16 %v422, %v420
  %v447 = vpack.c.b16 %v423, %v421
  %v448 = vpack.c.b16 %v426, %v424
  %v449 = vpack.c.b16 %v427, %v425
  %v450 = vpack.c.b16 %v430, %v428
  %v451 = vpack.c.b16 %v431, %v429
  %v452 = vpack.c.b16 %v434, %v432
  %v453 = vpack.c.b16 %v435, %v433
  %v454 = vpack.c.b16 %v438, %v436
  %v455 = vpack.c.b16 %v439, %v437
  %v456 = vpack.c.b16 %v442, %v440
  %v457 = vpack.c.b16 %v443, %v441
  %v458 = vpack.c.b16 %v444, %v444
  %v459 = vpack.c.b16 %v445, %v445
  %v473 = vsel %vm96, %v458, 0
  %v476 = vsel %vm96, %v459, 0
  %478 = vmatprep.subr.bf16.mxu0 0
  %479 = vmatpush1.bf16.msra.mxu0 0
  %480 = vmatprep.subr.bf16.mxu0 %v476
  %481 = vmatpush1.bf16.msra.mxu0 %v473
  %482 = vmatprep.subr.bf16.mxu0 %v457
  %483 = vmatpush1.bf16.msra.mxu0 %v456
  %484 = vmatprep.subr.bf16.mxu0 %v455
  %485 = vmatpush1.bf16.msra.mxu0 %v454
  %486 = vmatprep.subr.bf16.mxu0 %v453
  %487 = vmatpush1.bf16.msra.mxu0 %v452
  %488 = vmatprep.subr.bf16.mxu0 %v451
  %489 = vmatpush1.bf16.msra.mxu0 %v450
  %490 = vmatprep.subr.bf16.mxu0 %v449
  %491 = vmatpush1.bf16.msra.mxu0 %v448
  %492 = vmatprep.subr.bf16.mxu0 %v447
  %493 = vmatpush1.bf16.msra.mxu0 %v446
  %494 = vmatprep.subr.bf16.mxu0 0
  %495 = vmatpush2.bf16.msra.mxu0 0
  %496 = vmatprep.subr.bf16.mxu0 0
  %497 = vmatpush2.bf16.msra.mxu0 0
  %498 = vmatprep.subr.bf16.mxu0 0
  %499 = vmatpush2.bf16.msra.mxu0 0
  %500 = vmatprep.subr.bf16.mxu0 0
  %501 = vmatpush2.bf16.msra.mxu0 0
  %502 = vmatprep.subr.bf16.mxu0 0
  %503 = vmatpush2.bf16.msra.mxu0 0
  %504 = vmatprep.subr.bf16.mxu0 0
  %505 = vmatpush2.bf16.msra.mxu0 0
  %506 = vmatprep.subr.bf16.mxu0 0
  %507 = vmatpush2.bf16.msra.mxu0 0
  %508 = vmatprep.subr.bf16.mxu0 0
  %509 = vmatpush2.bf16.msra.mxu0 0
  %510 = vmatprep.mubr.bf16.mxu0 0
  %511 = vmatmul.mubr.bf16.gmra.mxu0 %v94
  %v512 = vpop.f32.mrf.mxu0
  %v513 = vadd.f32 0.0, %v512
  %v514 = vpop.f32.mrf.mxu0
  %v515 = vadd.f32 0.0, %v514
  %v516 = vpop.f32.mrf.mxu0
  %v517 = vpop.f32.mrf.mxu0
  %518 = vdwg.mxu0
  %v519 = vmax.f32 %v138, %v263
  %v520 = vmax.f32 %v140, %v265
  %v521 = vmax.f32 %v388, %v513
  %v522 = vmax.f32 %v390, %v515
  %v523 = vmax.f32 %v519, %v521
  %v524 = vmax.f32 %v520, %v522
  %v525 = vld [vmem:[%s1 + $0x1c0] sm:$0x11]
  %v526 = vunpack.c.l.bf16 %v525
  %v527 = vunpack.c.h.bf16 %v525
  %v528 = vlaneseq
  %v529 = vshrl.u32 %v528, 7
  %v530 = vsub.s32 0, %v529
  %v531 = vrot.slane %v526, %v530
  %v532 = vlaneseq
  %v533 = vshrl.u32 %v532, 7
  %v534 = vsub.s32 0, %v533
  %v535 = vrot.slane %v527, %v534
  %v536 = vadd.f32 %v523, %v531
  %v537 = vadd.f32 %v524, %v535
  %v538 = vmax.f32 %v536, 0.0
  %v539 = vmax.f32 %v537, 0.0
  %v540 = vpack.c.bf16 %v538, %v538
  %v541 = vpack.c.bf16 %v539, %v539
  %v542 = vld [vmem:[%s1 + $0x1d0] sm:$0xf]
  %v543 = vld [vmem:[%s1 + $0x1d8] sm:$0xf]
  %v544 = vld [vmem:[%s1 + $0x1e0] sm:$0xf]
  %v545 = vld [vmem:[%s1 + $0x1e8] sm:$0xf]
  %v546 = vld [vmem:[%s1 + $0x1f0] sm:$0xf]
  %v547 = vld [vmem:[%s1 + $0x1f8] sm:$0xf]
  %v548 = vld [vmem:[%s1 + $0x200] sm:$0xf]
  %v549 = vld [vmem:[%s1 + $0x208] sm:$0xf]
  %v550 = vld [vmem:[%s1 + $0x210] sm:$0xf]
  %v551 = vld [vmem:[%s1 + $0x218] sm:$0xf]
  %v552 = vld [vmem:[%s1 + $0x220] sm:$0xf]
  %v553 = vld [vmem:[%s1 + $0x228] sm:$0xf]
  %v554 = vld [vmem:[%s1 + $0x230] sm:$0xf]
  %v555 = vld [vmem:[%s1 + $0x238] sm:$0xf]
  %v556 = vld [vmem:[%s1 + $0x240] sm:$0xf]
  %v557 = vld [vmem:[%s1 + $0x248] sm:$0xf]
  %v558 = vld [vmem:[%s1 + $0x250] sm:$0xf]
  %v559 = vld [vmem:[%s1 + $0x258] sm:$0xf]
  %v560 = vld [vmem:[%s1 + $0x260] sm:$0xf]
  %v561 = vld [vmem:[%s1 + $0x268] sm:$0xf]
  %v562 = vld [vmem:[%s1 + $0x270] sm:$0x1]
  %v563 = vunpack.c.l.bf16 %v562
  %v564 = vlaneseq
  %v565 = vshrl.u32 %v564, 7
  %v566 = vsub.s32 0, %v565
  %v567 = vrot.slane %v563, %v566
  %v588 = vunpack.c.l.b16 %v542
  %v589 = vunpack.c.l.b16 %v543
  %v590 = vunpack.c.l.b16 %v544
  %v591 = vunpack.c.l.b16 %v545
  %v592 = vunpack.c.l.b16 %v546
  %v593 = vunpack.c.l.b16 %v547
  %v594 = vunpack.c.l.b16 %v548
  %v595 = vunpack.c.l.b16 %v549
  %v596 = vunpack.c.l.b16 %v550
  %v597 = vunpack.c.l.b16 %v551
  %v598 = vunpack.c.l.b16 %v552
  %v599 = vunpack.c.l.b16 %v553
  %v600 = vunpack.c.l.b16 %v554
  %v601 = vunpack.c.l.b16 %v555
  %v602 = vunpack.c.l.b16 %v556
  %v603 = vunpack.c.l.b16 %v557
  %v604 = vunpack.c.l.b16 %v558
  %v605 = vunpack.c.l.b16 %v559
  %v606 = vunpack.c.l.b16 %v560
  %v607 = vunpack.c.l.b16 %v561
  %v608 = vpack.c.b16 %v589, %v588
  %v609 = vpack.c.b16 %v591, %v590
  %v610 = vpack.c.b16 %v593, %v592
  %v611 = vpack.c.b16 %v595, %v594
  %v612 = vpack.c.b16 %v597, %v596
  %v613 = vpack.c.b16 %v599, %v598
  %v614 = vpack.c.b16 %v601, %v600
  %v615 = vpack.c.b16 %v603, %v602
  %v616 = vpack.c.b16 %v605, %v604
  %v617 = vpack.c.b16 %v607, %v606
  %vm628 = vcmask 261120
  %v630 = vsel %vm628, %v541, 0
  %632 = vmatprep.subr.bf16.mxu0 0
  %633 = vmatpush1.bf16.msra.mxu0 %v615
  %634 = vmatprep.subr.bf16.mxu0 0
  %635 = vmatpush1.bf16.msra.mxu0 %v614
  %636 = vmatprep.subr.bf16.mxu0 0
  %637 = vmatpush1.bf16.msra.mxu0 %v613
  %638 = vmatprep.subr.bf16.mxu0 0
  %639 = vmatpush1.bf16.msra.mxu0 %v612
  %640 = vmatprep.subr.bf16.mxu0 0
  %641 = vmatpush1.bf16.msra.mxu0 %v611
  %642 = vmatprep.subr.bf16.mxu0 0
  %643 = vmatpush1.bf16.msra.mxu0 %v610
  %644 = vmatprep.subr.bf16.mxu0 0
  %645 = vmatpush1.bf16.msra.mxu0 %v609
  %646 = vmatprep.subr.bf16.mxu0 0
  %647 = vmatpush1.bf16.msra.mxu0 %v608
  %648 = vmatprep.subr.bf16.mxu0 0
  %649 = vmatpush2.bf16.msra.mxu0 0
  %650 = vmatprep.subr.bf16.mxu0 0
  %651 = vmatpush2.bf16.msra.mxu0 0
  %652 = vmatprep.subr.bf16.mxu0 0
  %653 = vmatpush2.bf16.msra.mxu0 0
  %654 = vmatprep.subr.bf16.mxu0 0
  %655 = vmatpush2.bf16.msra.mxu0 0
  %656 = vmatprep.subr.bf16.mxu0 0
  %657 = vmatpush2.bf16.msra.mxu0 0
  %658 = vmatprep.subr.bf16.mxu0 0
  %659 = vmatpush2.bf16.msra.mxu0 0
  %660 = vmatprep.subr.bf16.mxu0 0
  %661 = vmatpush2.bf16.msra.mxu0 %v617
  %662 = vmatprep.subr.bf16.mxu0 0
  %663 = vmatpush2.bf16.msra.mxu0 %v616
  %664 = vmatprep.mubr.bf16.mxu0 %v630
  %665 = vmatmul.mubr.bf16.gmra.mxu0 %v540
  %v666 = vpop.f32.mrf.mxu0
  %v667 = vadd.f32 %v567, %v666
  %v668 = vpop.f32.mrf.mxu0
  %v669 = vpop.f32.mrf.mxu0
  %v670 = vpop.f32.mrf.mxu0
  %671 = vdwg.mxu0
  %v672 = vmax.f32 %v667, 0.0
  %v673 = vld [vmem:[%s1 + $0x280] sm:$0xf]
  %v674 = vld [vmem:[%s1 + $0x288] sm:$0xf]
  %v675 = vld [vmem:[%s1 + $0x290] sm:$0x3]
  %v676 = vld [vmem:[%s1 + $0x2a0] sm:$0x1]
  %v677 = vunpack.c.l.bf16 %v676
  %v678 = vlaneseq
  %v679 = vshrl.u32 %v678, 7
  %v680 = vsub.s32 0, %v679
  %v681 = vrot.slane %v677, %v680
  %683 = vrot.lane.b32.xlu0 %v13, 28
  %v684 = vpop.permute.xlu0 %683
  %v688 = vunpack.c.l.b16 %v673
  %v689 = vunpack.c.l.b16 %v674
  %v690 = vunpack.c.l.b16 %v675
  %v691 = vpack.c.b16 %v689, %v688
  %v692 = vpack.c.b16 %v690, %v690
  %vm694 = vcmask 162816
  %v696 = vsel %vm694, %v684, 0
  %v699 = vsel %vm96, %v692, 0
  %701 = vmatprep.subr.bf16.mxu0 0
  %702 = vmatpush1.bf16.msra.mxu0 0
  %703 = vmatprep.subr.bf16.mxu0 0
  %704 = vmatpush1.bf16.msra.mxu0 0
  %705 = vmatprep.subr.bf16.mxu0 0
  %706 = vmatpush1.bf16.msra.mxu0 0
  %707 = vmatprep.subr.bf16.mxu0 0
  %708 = vmatpush1.bf16.msra.mxu0 0
  %709 = vmatprep.subr.bf16.mxu0 0
  %710 = vmatpush1.bf16.msra.mxu0 0
  %711 = vmatprep.subr.bf16.mxu0 0
  %712 = vmatpush1.bf16.msra.mxu0 0
  %713 = vmatprep.subr.bf16.mxu0 0
  %714 = vmatpush1.bf16.msra.mxu0 %v699
  %715 = vmatprep.subr.bf16.mxu0 0
  %716 = vmatpush1.bf16.msra.mxu0 %v691
  %717 = vmatprep.subr.bf16.mxu0 0
  %718 = vmatpush2.bf16.msra.mxu0 0
  %719 = vmatprep.subr.bf16.mxu0 0
  %720 = vmatpush2.bf16.msra.mxu0 0
  %721 = vmatprep.subr.bf16.mxu0 0
  %722 = vmatpush2.bf16.msra.mxu0 0
  %723 = vmatprep.subr.bf16.mxu0 0
  %724 = vmatpush2.bf16.msra.mxu0 0
  %725 = vmatprep.subr.bf16.mxu0 0
  %726 = vmatpush2.bf16.msra.mxu0 0
  %727 = vmatprep.subr.bf16.mxu0 0
  %728 = vmatpush2.bf16.msra.mxu0 0
  %729 = vmatprep.subr.bf16.mxu0 0
  %730 = vmatpush2.bf16.msra.mxu0 0
  %731 = vmatprep.subr.bf16.mxu0 0
  %732 = vmatpush2.bf16.msra.mxu0 0
  %733 = vmatprep.mubr.bf16.mxu0 0
  %734 = vmatmul.mubr.bf16.gmra.mxu0 %v696
  %v735 = vpop.f32.mrf.mxu0
  %v736 = vadd.f32 %v681, %v735
  %v737 = vpop.f32.mrf.mxu0
  %v738 = vpop.f32.mrf.mxu0
  %v739 = vpop.f32.mrf.mxu0
  %740 = vdwg.mxu0
  %v741 = vmax.f32 %v736, 0.0
  %v742 = vpack.c.bf16 %v741, %v741
  %v743 = vld [vmem:[%s1 + $0x2b0] sm:$0xf]
  %v744 = vld [vmem:[%s1 + $0x2b8] sm:$0xf]
  %v745 = vld [vmem:[%s1 + $0x2c0] sm:$0x3]
  %v746 = vld [vmem:[%s1 + $0x2d0] sm:$0x1]
  %v747 = vunpack.c.l.bf16 %v746
  %v748 = vlaneseq
  %v749 = vshrl.u32 %v748, 7
  %v750 = vsub.s32 0, %v749
  %v751 = vrot.slane %v747, %v750
  %v755 = vunpack.c.l.b16 %v743
  %v756 = vunpack.c.l.b16 %v744
  %v757 = vunpack.c.l.b16 %v745
  %v758 = vpack.c.b16 %v756, %v755
  %v759 = vpack.c.b16 %v757, %v757
  %v762 = vsel %vm694, %v742, 0
  %v765 = vsel %vm96, %v759, 0
  %767 = vmatprep.subr.bf16.mxu0 0
  %768 = vmatpush1.bf16.msra.mxu0 0
  %769 = vmatprep.subr.bf16.mxu0 0
  %770 = vmatpush1.bf16.msra.mxu0 0
  %771 = vmatprep.subr.bf16.mxu0 0
  %772 = vmatpush1.bf16.msra.mxu0 0
  %773 = vmatprep.subr.bf16.mxu0 0
  %774 = vmatpush1.bf16.msra.mxu0 0
  %775 = vmatprep.subr.bf16.mxu0 0
  %776 = vmatpush1.bf16.msra.mxu0 0
  %777 = vmatprep.subr.bf16.mxu0 0
  %778 = vmatpush1.bf16.msra.mxu0 0
  %779 = vmatprep.subr.bf16.mxu0 0
  %780 = vmatpush1.bf16.msra.mxu0 %v765
  %781 = vmatprep.subr.bf16.mxu0 0
  %782 = vmatpush1.bf16.msra.mxu0 %v758
  %783 = vmatprep.subr.bf16.mxu0 0
  %784 = vmatpush2.bf16.msra.mxu0 0
  %785 = vmatprep.subr.bf16.mxu0 0
  %786 = vmatpush2.bf16.msra.mxu0 0
  %787 = vmatprep.subr.bf16.mxu0 0
  %788 = vmatpush2.bf16.msra.mxu0 0
  %789 = vmatprep.subr.bf16.mxu0 0
  %790 = vmatpush2.bf16.msra.mxu0 0
  %791 = vmatprep.subr.bf16.mxu0 0
  %792 = vmatpush2.bf16.msra.mxu0 0
  %793 = vmatprep.subr.bf16.mxu0 0
  %794 = vmatpush2.bf16.msra.mxu0 0
  %795 = vmatprep.subr.bf16.mxu0 0
  %796 = vmatpush2.bf16.msra.mxu0 0
  %797 = vmatprep.subr.bf16.mxu0 0
  %798 = vmatpush2.bf16.msra.mxu0 0
  %799 = vmatprep.mubr.bf16.mxu0 0
  %800 = vmatmul.mubr.bf16.gmra.mxu0 %v762
  %v801 = vpop.f32.mrf.mxu0
  %v802 = vadd.f32 %v751, %v801
  %v803 = vpop.f32.mrf.mxu0
  %v804 = vpop.f32.mrf.mxu0
  %v805 = vpop.f32.mrf.mxu0
  %806 = vdwg.mxu0
  %v807 = vmax.f32 %v802, 0.0
  %v808 = vpack.c.bf16 %v672, %v672
  %v809 = vld [vmem:[%s1 + $0x2e0] sm:$0xf]
  %v810 = vld [vmem:[%s1 + $0x2e8] sm:$0x1]
  %v811 = vpack.c.bf16 %v807, %v807
  %v812 = vld [vmem:[%s1 + $0x2f0] sm:$0xf]
  %v813 = vld [vmem:[%s1 + $0x2f8] sm:$0x1]
  %v816 = vunpack.c.l.b16 %v812
  %v817 = vunpack.c.l.b16 %v813
  %v818 = vpack.c.b16 %v817, %v816
  %vm819 = vcmask 80896
  %v821 = vsel %vm819, %v811, 0
  %vm823 = vcmask 1044480
  %v825 = vsel %vm823, %v818, 0
  %827 = vmatprep.subr.bf16.mxu0 0
  %828 = vmatpush1.bf16.msra.mxu0 0
  %829 = vmatprep.subr.bf16.mxu0 0
  %830 = vmatpush1.bf16.msra.mxu0 0
  %831 = vmatprep.subr.bf16.mxu0 0
  %832 = vmatpush1.bf16.msra.mxu0 0
  %833 = vmatprep.subr.bf16.mxu0 0
  %834 = vmatpush1.bf16.msra.mxu0 0
  %835 = vmatprep.subr.bf16.mxu0 0
  %836 = vmatpush1.bf16.msra.mxu0 0
  %837 = vmatprep.subr.bf16.mxu0 0
  %838 = vmatpush1.bf16.msra.mxu0 0
  %839 = vmatprep.subr.bf16.mxu0 0
  %840 = vmatpush1.bf16.msra.mxu0 0
  %841 = vmatprep.subr.bf16.mxu0 0
  %842 = vmatpush1.bf16.msra.mxu0 %v825
  %843 = vmatprep.subr.bf16.mxu0 0
  %844 = vmatpush2.bf16.msra.mxu0 0
  %845 = vmatprep.subr.bf16.mxu0 0
  %846 = vmatpush2.bf16.msra.mxu0 0
  %847 = vmatprep.subr.bf16.mxu0 0
  %848 = vmatpush2.bf16.msra.mxu0 0
  %849 = vmatprep.subr.bf16.mxu0 0
  %850 = vmatpush2.bf16.msra.mxu0 0
  %851 = vmatprep.subr.bf16.mxu0 0
  %852 = vmatpush2.bf16.msra.mxu0 0
  %853 = vmatprep.subr.bf16.mxu0 0
  %854 = vmatpush2.bf16.msra.mxu0 0
  %855 = vmatprep.subr.bf16.mxu0 0
  %856 = vmatpush2.bf16.msra.mxu0 0
  %857 = vmatprep.subr.bf16.mxu0 0
  %858 = vmatpush2.bf16.msra.mxu0 0
  %859 = vmatprep.mubr.bf16.mxu0 0
  %860 = vmatmul.mubr.bf16.gmra.mxu0 %v821
  %v861 = vpop.f32.mrf.mxu0
  %v862 = vadd.f32 0.0, %v861
  %v863 = vpop.f32.mrf.mxu0
  %v864 = vpop.f32.mrf.mxu0
  %v865 = vpop.f32.mrf.mxu0
  %866 = vdwg.mxu0
  %v869 = vunpack.c.l.b16 %v809
  %v870 = vunpack.c.l.b16 %v810
  %v871 = vpack.c.b16 %v870, %v869
  %v873 = vsel %vm819, %v808, 0
  %v876 = vsel %vm823, %v871, 0
  %878 = vmatprep.subr.bf16.mxu0 0
  %879 = vmatpush1.bf16.msra.mxu0 0
  %880 = vmatprep.subr.bf16.mxu0 0
  %881 = vmatpush1.bf16.msra.mxu0 0
  %882 = vmatprep.subr.bf16.mxu0 0
  %883 = vmatpush1.bf16.msra.mxu0 0
  %884 = vmatprep.subr.bf16.mxu0 0
  %885 = vmatpush1.bf16.msra.mxu0 0
  %886 = vmatprep.subr.bf16.mxu0 0
  %887 = vmatpush1.bf16.msra.mxu0 0
  %888 = vmatprep.subr.bf16.mxu0 0
  %889 = vmatpush1.bf16.msra.mxu0 0
  %890 = vmatprep.subr.bf16.mxu0 0
  %891 = vmatpush1.bf16.msra.mxu0 0
  %892 = vmatprep.subr.bf16.mxu0 0
  %893 = vmatpush1.bf16.msra.mxu0 %v876
  %894 = vmatprep.subr.bf16.mxu0 0
  %895 = vmatpush2.bf16.msra.mxu0 0
  %896 = vmatprep.subr.bf16.mxu0 0
  %897 = vmatpush2.bf16.msra.mxu0 0
  %898 = vmatprep.subr.bf16.mxu0 0
  %899 = vmatpush2.bf16.msra.mxu0 0
  %900 = vmatprep.subr.bf16.mxu0 0
  %901 = vmatpush2.bf16.msra.mxu0 0
  %902 = vmatprep.subr.bf16.mxu0 0
  %903 = vmatpush2.bf16.msra.mxu0 0
  %904 = vmatprep.subr.bf16.mxu0 0
  %905 = vmatpush2.bf16.msra.mxu0 0
  %906 = vmatprep.subr.bf16.mxu0 0
  %907 = vmatpush2.bf16.msra.mxu0 0
  %908 = vmatprep.subr.bf16.mxu0 0
  %909 = vmatpush2.bf16.msra.mxu0 0
  %910 = vmatprep.mubr.bf16.mxu0 0
  %911 = vmatmul.mubr.bf16.gmra.mxu0 %v873
  %v912 = vpop.f32.mrf.mxu0
  %v913 = vadd.f32 %v862, %v912
  %v914 = vpop.f32.mrf.mxu0
  %v915 = vpop.f32.mrf.mxu0
  %v916 = vpop.f32.mrf.mxu0
  %917 = vdwg.mxu0
  %v918 = vld [vmem:[%s1 + $0x300] sm:$0x1]
  %v919 = vunpack.c.l.bf16 %v918
  %v920 = vlaneseq
  %v921 = vshrl.u32 %v920, 7
  %v922 = vsub.s32 0, %v921
  %v923 = vrot.slane %v919, %v922
  %v924 = vadd.f32 %v913, %v923
  %v925 = vmul.f32 %v924, 0.5
  %v926 = vmul.f32 %v925, 1.442695
  %v927 = vpow.pop %v926
  %929 = vrot.lane.b32.xlu0 %v12, 16
  %v930 = vpop.permute.xlu0 %929
  %v932 = vmul.f32 %v927, %v930
  %934 = vrot.lane.b32.xlu0 %v932, 120
  %v935 = vpop.permute.xlu0 %934
  %v937 = vadd.f32 %v924, %v935
  %939 = vrot.lane.b32.xlu0 %v937, 16
  %v940 = vpop.permute.xlu0 %939
  %vm942 = vcmask 130048
  %v943 = vsel %vm942, %v924, %v940
  %vm944 = vcmask 189440
  %945 = vst.msk [vmem:[%s2] sm:$0x3] %vm944, %v943
  // Predicated region
  $region10: #{encoder_forward.1} parent=0 // pred_check
    _
  $region11: #{encoder_forward.1} parent=0 // pred_check_branch
    %947 = sbr.rel (0) target = $region13
  $region12: #{encoder_forward.1} parent=0 // pred_region
    _
  $region13: #{encoder_forward.1} parent=0 // pred_fallthru
    _
  // Predicated region
  $region14: #{encoder_forward.1} parent=0 // pred_check
    _
  $region15: #{encoder_forward.1} parent=0 // pred_check_branch
    %949 = sbr.rel (0) target = $region17
  $region16: #{encoder_forward.1} parent=0 // pred_region
    _
  $region17: #{encoder_forward.1} parent=0 // pred_fallthru
    _

</llo_original>
